<compile_context>
chip_gen: v7x
topology: tpu7x:2x2x1
jax: 0.10.0
libtpu: 0.0.40
codegen_flags: <defaults>
</compile_context>

<pallas_src>
import functools

import jax
import jax.numpy as jnp
from jax.experimental import pallas as pl
from jax.experimental.pallas import tpu as pltpu


def _cdiv(a, b):
    return (a + b - 1) // b


def _round_up(a, m):
    return _cdiv(a, m) * m


# --------------------------------------------------------------------------
# Kernel
# --------------------------------------------------------------------------
def _f1_partial_kernel(inp_ref, tgt_ref, tp_ref, sx_ref, st_ref, *,
                       n_rows, tile_n, steps_per_split, n_full_tiles,
                       needs_mask):
    p = pl.program_id(0)   # parallel split (TensorCore axis)
    t = pl.program_id(2)   # reduction step within this (split, class-block)

    # Fresh accumulators at the start of each (split, class-block) reduction.
    @pl.when(t == 0)
    def _():
        tp_ref[...] = jnp.zeros_like(tp_ref)
        sx_ref[...] = jnp.zeros_like(sx_ref)
        st_ref[...] = jnp.zeros_like(st_ref)

    x = inp_ref[...].astype(jnp.float32)   # (tile_n, tile_c)
    y = tgt_ref[...].astype(jnp.float32)   # (tile_n, tile_c)
    c = x.shape[-1]

    def fold8(a):
        # (tile_n, tile_c) -> (8, tile_c): adds corresponding vreg rows (pure
        # VALU); the single cross-sublane 8 -> 1 reduce is deferred to the
        # JAX epilogue instead of happening three times per grid step.
        return a.reshape(tile_n // 8, 8, c).sum(axis=0)

    def accumulate(xv, yv):
        tp_ref[...] += fold8(yv * xv)   # sum_b target * input
        sx_ref[...] += fold8(xv)        # sum_b input
        st_ref[...] += fold8(yv)        # sum_b target

    if needs_mask:
        gtile = p * steps_per_split + t

        # Fast path: full tiles pay no masking cost.
        @pl.when(gtile < n_full_tiles)
        def _():
            accumulate(x, y)

        # Boundary (partial) or dead tile: zero rows past the logical end.
        @pl.when(gtile >= n_full_tiles)
        def _():
            start = gtile * tile_n
            rows = start + jax.lax.broadcasted_iota(jnp.int32, x.shape, 0)
            valid = rows < n_rows
            accumulate(jnp.where(valid, x, 0.0), jnp.where(valid, y, 0.0))
    else:
        accumulate(x, y)


# --------------------------------------------------------------------------
# Hardware-aware configuration helpers
# --------------------------------------------------------------------------
def _tpu_info():
    try:
        return pltpu.get_tpu_info()
    except Exception:
        return None


def _vmem_capacity_bytes(info):
    cap = getattr(info, "vmem_capacity_bytes", None) if info is not None else None
    try:
        cap = int(cap) if cap else None
    except Exception:
        cap = None
    if not cap or cap <= 0:
        cap = 64 * 1024 * 1024       # conservative default (v7x per-TC VMEM)
    return cap


def _resolve_num_splits(requested, info, vmem_cap):
    if requested is not None:
        return max(1, int(requested))
    cores = None
    if info is not None:
        for attr in ("num_tensorcores", "tensorcore_count", "num_cores",
                     "cores_per_chip", "core_count"):
            v = getattr(info, attr, None)
            if v is None:
                continue
            try:
                v = int(v)
            except Exception:
                continue
            if v > 0:
                cores = v
                break
    if cores is None:
        # Heuristic: v7x-class parts expose ~64 MiB VMEM per TC and have 2
        # TensorCores; v5e/v6e expose 128 MiB and a single TensorCore.
        cores = 2 if vmem_cap <= 80 * 1024 * 1024 else 1
    return max(1, min(cores, 8))


def _pick_tile_c(C):
    # Block the class axis only for large C (bounds live vregs in fold8).
    # Non-128-multiple C is handled with a full-width block (lane-masked but
    # correct); padding in the wrapper would cost an extra HBM pass.
    if C <= 512:
        return C
    for cand in (512, 256, 128):
        if C % cand == 0:
            return cand
    return C


# --------------------------------------------------------------------------
# Wrapper
# --------------------------------------------------------------------------
def f1_loss(inputs, targets, *, tile_n=None, num_splits=None):
    """Pallas TPU implementation of F1Loss.forward for (N, C) arrays."""
    N, C = inputs.shape
    assert targets.shape == (N, C)

    info = _tpu_info()
    vmem_cap = _vmem_capacity_bytes(info)
    # Input-buffer budget (2 inputs x 2 pipeline buffers) and scoped-VMEM
    # limit, both derived from the chip's per-TensorCore VMEM capacity.
    vmem_budget = min(vmem_cap * 3 // 8, 48 * 1024 * 1024)
    vmem_limit = min(vmem_cap * 3 // 4, 96 * 1024 * 1024)
    row_cap = 16384 if vmem_cap >= 100 * 1024 * 1024 else 8192

    itemsize = max(jnp.dtype(inputs.dtype).itemsize,
                   jnp.dtype(targets.dtype).itemsize)
    align = max(8, 32 // itemsize)    # sublane packing: 8 f32 / 16 bf16 / 32 i8

    tile_c = _pick_tile_c(C)
    NC = _cdiv(C, tile_c)

    max_tile = vmem_budget // (4 * tile_c * itemsize)
    max_tile = max(align, (max_tile // align) * align)
    max_tile = min(max_tile, row_cap)

    P = _resolve_num_splits(num_splits, info, vmem_cap)
    P = max(1, min(P, _cdiv(N, align)))   # each split gets >= one aligned tile

    if tile_n is None:
        # Auto-tiling: choose (tile_n, T) so P*T tiles exactly cover N with no
        # fully-dead tiles; only the last tile may be ragged.
        rows_per_split = _cdiv(N, P)
        T = max(1, _cdiv(rows_per_split, max_tile))
        tile_n = _round_up(_cdiv(rows_per_split, T), align)
        if P > 1 and (P * T - 1) * tile_n >= N:
            # Degenerate split (tiny N): fall back to a single split.
            P = 1
            T = max(1, _cdiv(N, max_tile))
            tile_n = _round_up(_cdiv(N, T), align)
    else:
        assert tile_n % align == 0, (tile_n, align)
        total_tiles = _cdiv(N, tile_n)
        P = max(1, min(P, total_tiles))
        T = _cdiv(total_tiles, P)

    n_full_tiles = N // tile_n
    last_block = _cdiv(N, tile_n) - 1      # last block that exists in HBM
    needs_mask = (P * T * tile_n != N)

    def in_index_map(p, c, t):
        # Clamp so (user-tile_n-only) fully-dead tiles re-read a valid block;
        # their contribution is zeroed by the gated row mask in the kernel.
        return (jnp.minimum(p * T + t, last_block), c)

    def out_index_map(p, c, t):
        return (p, c)   # one resident (8, tile_c) accumulator per (split, c)

    kernel = functools.partial(
        _f1_partial_kernel,
        n_rows=N, tile_n=tile_n, steps_per_split=T,
        n_full_tiles=n_full_tiles, needs_mask=needs_mask)

    partial_shape = jax.ShapeDtypeStruct((P * 8, C), jnp.float32)

    tp_p, sx_p, st_p = pl.pallas_call(
        kernel,
        out_shape=(partial_shape, partial_shape, partial_shape),
        grid_spec=pltpu.PrefetchScalarGridSpec(
            num_scalar_prefetch=0,
            grid=(P, NC, T),
            in_specs=[
                pl.BlockSpec((tile_n, tile_c), in_index_map),
                pl.BlockSpec((tile_n, tile_c), in_index_map),
            ],
            out_specs=[
                pl.BlockSpec((8, tile_c), out_index_map),
                pl.BlockSpec((8, tile_c), out_index_map),
                pl.BlockSpec((8, tile_c), out_index_map),
            ],
        ),
        compiler_params=pltpu.CompilerParams(
            dimension_semantics=("parallel", "parallel", "arbitrary"),
            vmem_limit_bytes=vmem_limit,
        ),
    )(inputs, targets)

    # Tiny epilogue over C elements: combine splits + sublanes, then F1.
    tp = tp_p.sum(axis=0)
    sum_x = sx_p.sum(axis=0)
    sum_t = st_p.sum(axis=0)
    fp = sum_x - tp
    fn = sum_t - tp
    prec = tp / (tp + fp + 1e-9)
    rec = tp / (tp + fn + 1e-9)
    f1 = 2.0 * prec * rec / (prec + rec + 1e-9)
    f1 = jnp.where(jnp.isnan(f1), 0.0, f1)
    return (1.0 - jnp.mean(f1)).astype(jnp.float32)


# --------------------------------------------------------------------------
# Pure-JAX reference (mirrors the PyTorch module) + demo
# --------------------------------------------------------------------------
def _f1_loss_ref(inputs, targets):
    x = inputs.astype(jnp.float32)
    t = targets.astype(jnp.float32)
    tp = (t * x).sum(0)
    fp = ((1.0 - t) * x).sum(0)
    fn = (t * (1.0 - x)).sum(0)
    p = tp / (tp + fp + 1e-9)
    r = tp / (tp + fn + 1e-9)
    f1 = 2.0 * p * r / (p + r + 1e-9)
    f1 = jnp.where(jnp.isnan(f1), 0.0, f1)
    return 1.0 - f1.mean()


if __name__ == "__main__":
    key = jax.random.PRNGKey(0)
    k1, k2, k3, k4 = jax.random.split(key, 4)

    # Case 1: auto tile sizing (no ragged boundary, fast path only).
    N1, C1 = 80, 128
    x1 = jax.random.uniform(k1, (N1, C1), dtype=jnp.float32)
    t1 = (jax.random.uniform(k2, (N1, C1)) > 0.5).astype(jnp.float32)
    out1 = jax.block_until_ready(f1_loss(x1, t1))
    ref1 = jax.block_until_ready(_f1_loss_ref(x1, t1))
    assert jnp.allclose(out1, ref1, atol=1e-5, rtol=1e-5), (out1, ref1)

    # Case 2: user tile_n with a ragged batch -> multi-step reduction plus the
    # pl.when-gated boundary-tile masking path (and clamped dead tile if P=2).
    N2, C2 = 76, 128
    x2 = jax.random.uniform(k3, (N2, C2), dtype=jnp.float32)
    t2 = (jax.random.uniform(k4, (N2, C2)) > 0.5).astype(jnp.float32)
    out2 = jax.block_until_ready(f1_loss(x2, t2, tile_n=32))
    ref2 = jax.block_until_ready(_f1_loss_ref(x2, t2))
    assert jnp.allclose(out2, ref2, atol=1e-5, rtol=1e-5), (out2, ref2)

    print("KERNEL_OK")
</pallas_src>

<mosaic_0001>
module attributes {stable_mosaic.version = 11 : i64} {
  func.func @_f1_partial_kernel(%arg0: i32, %arg1: i32, %arg2: i32, %arg3: memref<40x128xf32, #tpu.memory_space<vmem>>, %arg4: memref<40x128xf32, #tpu.memory_space<vmem>>, %arg5: memref<8x128xf32, #tpu.memory_space<vmem>>, %arg6: memref<8x128xf32, #tpu.memory_space<vmem>>, %arg7: memref<8x128xf32, #tpu.memory_space<vmem>>) attributes {dimension_semantics = [#tpu.dimension_semantics<parallel>, #tpu.dimension_semantics<parallel>, #tpu.dimension_semantics<arbitrary>], iteration_bounds = array<i64: 2, 1, 1>, scalar_prefetch = 0 : i64, scratch_operands = 0 : i64, tpu.core_type = #tpu.core_type<tc>, window_params = [{transform_indices = @transform_0, window_bounds = array<i64: 40, 128>}, {transform_indices = @transform_1, window_bounds = array<i64: 40, 128>}, {transform_indices = @transform_2, window_bounds = array<i64: 8, 128>}, {transform_indices = @transform_3, window_bounds = array<i64: 8, 128>}, {transform_indices = @transform_4, window_bounds = array<i64: 8, 128>}]} {
    %c0_i32 = arith.constant 0 : i32
    %0 = arith.cmpi eq, %arg2, %c0_i32 : i32
    %1 = arith.extui %0 : i1 to i32
    %c0_i32_0 = arith.constant 0 : i32
    %2 = arith.cmpi ne, %1, %c0_i32_0 : i32
    scf.if %2 {
      %cst_18 = arith.constant 0.000000e+00 : f32
      %21 = vector.broadcast %cst_18 : f32 to vector<8x128xf32>
      %c0_19 = arith.constant 0 : index
      %c0_20 = arith.constant 0 : index
      %22 = vector.load %arg5[%c0_19, %c0_20] : memref<8x128xf32, #tpu.memory_space<vmem>>, vector<8x128xf32>
      tpu.vector_store %arg5[%c0_19, %c0_20], %21 {strides = array<i32>} : memref<8x128xf32, #tpu.memory_space<vmem>>, vector<8x128xf32>,
      %cst_21 = arith.constant 0.000000e+00 : f32
      %23 = vector.broadcast %cst_21 : f32 to vector<8x128xf32>
      %c0_22 = arith.constant 0 : index
      %c0_23 = arith.constant 0 : index
      %24 = vector.load %arg6[%c0_22, %c0_23] : memref<8x128xf32, #tpu.memory_space<vmem>>, vector<8x128xf32>
      tpu.vector_store %arg6[%c0_22, %c0_23], %23 {strides = array<i32>} : memref<8x128xf32, #tpu.memory_space<vmem>>, vector<8x128xf32>,
      %cst_24 = arith.constant 0.000000e+00 : f32
      %25 = vector.broadcast %cst_24 : f32 to vector<8x128xf32>
      %c0_25 = arith.constant 0 : index
      %c0_26 = arith.constant 0 : index
      %26 = vector.load %arg7[%c0_25, %c0_26] : memref<8x128xf32, #tpu.memory_space<vmem>>, vector<8x128xf32>
      tpu.vector_store %arg7[%c0_25, %c0_26], %25 {strides = array<i32>} : memref<8x128xf32, #tpu.memory_space<vmem>>, vector<8x128xf32>,
    } else {
    }
    %c0 = arith.constant 0 : index
    %c0_1 = arith.constant 0 : index
    %3 = vector.load %arg3[%c0, %c0_1] : memref<40x128xf32, #tpu.memory_space<vmem>>, vector<40x128xf32>
    %c0_2 = arith.constant 0 : index
    %c0_3 = arith.constant 0 : index
    %4 = vector.load %arg4[%c0_2, %c0_3] : memref<40x128xf32, #tpu.memory_space<vmem>>, vector<40x128xf32>
    %c0_4 = arith.constant 0 : index
    %c0_5 = arith.constant 0 : index
    %5 = vector.load %arg5[%c0_4, %c0_5] : memref<8x128xf32, #tpu.memory_space<vmem>>, vector<8x128xf32>
    %6 = arith.mulf %4, %3 : vector<40x128xf32>
    %7 = vector.shape_cast %6 : vector<40x128xf32> to vector<5x8x128xf32>
    %cst = arith.constant dense<0.000000e+00> : vector<8x128xf32>
    %8 = vector.multi_reduction <add>, %7, %cst [0] : vector<5x8x128xf32> to vector<8x128xf32>
    %9 = arith.addf %5, %8 : vector<8x128xf32>
    %c0_6 = arith.constant 0 : index
    %c0_7 = arith.constant 0 : index
    %10 = vector.load %arg5[%c0_6, %c0_7] : memref<8x128xf32, #tpu.memory_space<vmem>>, vector<8x128xf32>
    tpu.vector_store %arg5[%c0_6, %c0_7], %9 {strides = array<i32>} : memref<8x128xf32, #tpu.memory_space<vmem>>, vector<8x128xf32>,
    %c0_8 = arith.constant 0 : index
    %c0_9 = arith.constant 0 : index
    %11 = vector.load %arg6[%c0_8, %c0_9] : memref<8x128xf32, #tpu.memory_space<vmem>>, vector<8x128xf32>
    %12 = vector.shape_cast %3 : vector<40x128xf32> to vector<5x8x128xf32>
    %cst_10 = arith.constant dense<0.000000e+00> : vector<8x128xf32>
    %13 = vector.multi_reduction <add>, %12, %cst_10 [0] : vector<5x8x128xf32> to vector<8x128xf32>
    %14 = arith.addf %11, %13 : vector<8x128xf32>
    %c0_11 = arith.constant 0 : index
    %c0_12 = arith.constant 0 : index
    %15 = vector.load %arg6[%c0_11, %c0_12] : memref<8x128xf32, #tpu.memory_space<vmem>>, vector<8x128xf32>
    tpu.vector_store %arg6[%c0_11, %c0_12], %14 {strides = array<i32>} : memref<8x128xf32, #tpu.memory_space<vmem>>, vector<8x128xf32>,
    %c0_13 = arith.constant 0 : index
    %c0_14 = arith.constant 0 : index
    %16 = vector.load %arg7[%c0_13, %c0_14] : memref<8x128xf32, #tpu.memory_space<vmem>>, vector<8x128xf32>
    %17 = vector.shape_cast %4 : vector<40x128xf32> to vector<5x8x128xf32>
    %cst_15 = arith.constant dense<0.000000e+00> : vector<8x128xf32>
    %18 = vector.multi_reduction <add>, %17, %cst_15 [0] : vector<5x8x128xf32> to vector<8x128xf32>
    %19 = arith.addf %16, %18 : vector<8x128xf32>
    %c0_16 = arith.constant 0 : index
    %c0_17 = arith.constant 0 : index
    %20 = vector.load %arg7[%c0_16, %c0_17] : memref<8x128xf32, #tpu.memory_space<vmem>>, vector<8x128xf32>
    tpu.vector_store %arg7[%c0_16, %c0_17], %19 {strides = array<i32>} : memref<8x128xf32, #tpu.memory_space<vmem>>, vector<8x128xf32>,
    return
  }
  func.func @transform_0(%arg0: i32, %arg1: i32, %arg2: i32) -> (i32, i32) {
    %c1_i32 = arith.constant 1 : i32
    %0 = arith.muli %arg0, %c1_i32 : i32
    %1 = arith.addi %0, %arg2 : i32
    %c1_i32_0 = arith.constant 1 : i32
    %2 = arith.minsi %1, %c1_i32_0 : i32
    %c0_i32 = arith.constant 0 : i32
    return %2, %arg1 : i32, i32
  }
  func.func @transform_1(%arg0: i32, %arg1: i32, %arg2: i32) -> (i32, i32) {
    %c1_i32 = arith.constant 1 : i32
    %0 = arith.muli %arg0, %c1_i32 : i32
    %1 = arith.addi %0, %arg2 : i32
    %c1_i32_0 = arith.constant 1 : i32
    %2 = arith.minsi %1, %c1_i32_0 : i32
    %c0_i32 = arith.constant 0 : i32
    return %2, %arg1 : i32, i32
  }
  func.func @transform_2(%arg0: i32, %arg1: i32, %arg2: i32) -> (i32, i32) {
    %c0_i32 = arith.constant 0 : i32
    return %arg0, %arg1 : i32, i32
  }
  func.func @transform_3(%arg0: i32, %arg1: i32, %arg2: i32) -> (i32, i32) {
    %c0_i32 = arith.constant 0 : i32
    return %arg0, %arg1 : i32, i32
  }
  func.func @transform_4(%arg0: i32, %arg1: i32, %arg2: i32) -> (i32, i32) {
    %c0_i32 = arith.constant 0 : i32
    return %arg0, %arg1 : i32, i32
  }
}

</mosaic_0001>

<llo_original>
// kernel: tpu_custom_call.1
$region0: #{tpu_custom_call.1}
  #allocation0 [shape = 'u32[]', space=smem, size = 0x4, offset = 0x4, fixed_abs, tag = 'smem constant byte address 0x4 - core index']
  #allocation1 [shape = 'u32[144,128]{1,0:T(1,128)}', space=vmem, size = 0x12000, scoped, tag = 'internal scratch']
  %s0 = inlined_call_operand.hbm [shape: f32[80,128], index: 0, kind: input, shape index: {}]
  %s1 = inlined_call_operand.hbm [shape: f32[80,128], index: 1, kind: input, shape index: {}]
  %s2 = inlined_call_operand.hbm [shape: f32[16,128], index: 2, kind: output, shape index: {0}]
  %s3 = inlined_call_operand.hbm [shape: f32[16,128], index: 3, kind: output, shape index: {1}]
  %s4 = inlined_call_operand.hbm [shape: f32[16,128], index: 4, kind: output, shape index: {2}]
  %5 = xla_tuple %s2, %s3, %s4
  %s6 = sld [smem:[#allocation0]]
  $region69: #{tpu_custom_call.1} parent=0
    _
  %s8 = ssub.s32 1, %s6
  %s9 = scalar_select 0, %s8, %s6
  $region1: #{tpu_custom_call.1} parent=0
    #allocation2 [shape = 'u8[40960]{0}', space=vmem, size = 0xa000, scoped, tag = 'input window, operand 0']
    #allocation3 [shape = 's32[2]{0}', space=sflag, size = 0x8, scoped, tag = 'scoped memory for tpu_custom_call.1']
    #allocation4 [shape = 's32[2]{0}', space=sflag, size = 0x8, scoped, tag = 'scoped memory for tpu_custom_call.1']
    #allocation5 [shape = 'u8[40960]{0}', space=vmem, size = 0xa000, scoped, tag = 'input window, operand 1']
    #allocation6 [shape = 's32[2]{0}', space=sflag, size = 0x8, scoped, tag = 'scoped memory for tpu_custom_call.1']
    #allocation7 [shape = 'u8[8192]{0}', space=vmem, size = 0x2000, scoped, tag = 'output window, operand 0']
    #allocation8 [shape = 'u8[8192]{0}', space=vmem, size = 0x2000, scoped, tag = 'output window, operand 1']
    #allocation9 [shape = 's32[2]{0}', space=sflag, size = 0x8, scoped, tag = 'scoped memory for tpu_custom_call.1']
    #allocation10 [shape = 'u8[8192]{0}', space=vmem, size = 0x2000, scoped, tag = 'output window, operand 2']
    %10 = vsyncpa [#allocation3], 0
    %s11 = scalar_lea.sflag [#allocation3], 1
    %12 = vsyncpa %s11, 0
    %13 = vsyncpa [#allocation6], 0
    %s14 = scalar_lea.sflag [#allocation6], 1
    %15 = vsyncpa %s14, 0
    %16 = vsyncpa [#allocation4], 0
    %s17 = scalar_lea.sflag [#allocation4], 1
    %18 = vsyncpa %s17, 0
    %19 = vsyncpa [#allocation9], 0
    %s20 = scalar_lea.sflag [#allocation9], 1
    %21 = vsyncpa %s20, 0
    loop: start=0, step=1, limit=4
    $region2: #{tpu_custom_call.1} parent=1 // loop_pre_header
      _
    $region3: #{tpu_custom_call.1} parent=1 // loop_header
      %s23 = sphi 0, %s27
      %p24 = scmp.ge.s32.totalorder %s23, 4
      %s30 = sphi 0, %s49
      %s31 = sphi 0, %s45
      %s32 = sphi 0, %s41
      %s33 = sphi 0, %s30
      %s34 = sphi 0, %s31
      %s35 = sphi 0, %s32
      %s36 = sphi 0, %s33
      %s37 = sphi 0, %s34
      %s38 = sphi 0, %s35
      %s60 = sphi 0, %s62
      %s63 = sphi 0, %s60
      %s64 = sphi 0, %s63
      %s80 = sphi 0, %s64
      %s94 = sphi 0, %s96
      %s97 = sphi 0, %s94
      %s98 = sphi 0, %s97
      %s114 = sphi 0, %s98
      %s122 = sphi 0, %s124
      %s125 = sphi 0, %s122
      %s126 = sphi 0, %s125
      %s142 = sphi 0, %s126
      %s150 = sphi 0, %s152
      %s153 = sphi 0, %s150
      %s154 = sphi 0, %s153
      %s170 = sphi 0, %s154
      %s178 = sphi 0, %s180
      %s181 = sphi 0, %s178
      %s182 = sphi 0, %s181
      %s198 = sphi 0, %s182
    $region4: #{tpu_custom_call.1} parent=1 // loop_header_branch
      %26 = sbr.rel (%p24) target = $region8
    $region5: #{tpu_custom_call.1} parent=1 // loop_body
      %s28 = ssub.s32 %s23, 1
      %s29 = ssub.s32 %s23, 2
      %s39 = sadd.s32 1, %s32
      %p40 = scmp.ge.s32.totalorder %s39, 1
      %s41 = scalar_select %p40, 0, %s39
      %s42 = sadd.s32 1, %s31
      %s43 = scalar_select %p40, %s42, %s31
      %p44 = scmp.ge.s32.totalorder %s43, 1
      %s45 = scalar_select %p44, 0, %s43
      %s46 = sadd.s32 1, %s30
      %s47 = scalar_select %p44, %s46, %s30
      %p48 = scmp.ge.s32.totalorder %s47, 2
      %s49 = scalar_select %p48, 0, %s47
      %s50 = sadd.s32 %s30, %s32
      %p51 = scmp.lt.s32.totalorder %s50, 1
      %s52 = scalar_select %p51, %s50, 1
      %s53 = sadd.s32 %s49, %s41
      %p54 = scmp.lt.s32.totalorder %s53, 1
      %s55 = scalar_select %p54, %s53, 1
      %s56 = ssub.s32 %s52, %s55
      %s57 = ssub.s32 %s31, %s45
      %s58 = sor.u32 %s56, %s57
      %p59 = scmp.eq.s32.totalorder %s58, 0
      %s61 = sadd.s32 %s60, 1
      %s62 = scalar_select %p59, %s60, %s61
      %p65 = pneg %p59
      %p66 = scmp.eq.s32.totalorder %s23, 1
      %p67 = por %p65, %p66
      %p68 = scmp.ne.s32.totalorder %s60, %s63
      %p69 = scmp.eq.s32.totalorder %s23, 0
      %p70 = por %p68, %p69
      %p71 = scmp.ne.s32.totalorder %s60, %s63
      %p72 = scmp.eq.s32.totalorder %s28, 1
      %p73 = por %p71, %p72
      %p74 = scmp.ne.s32.totalorder %s63, %s64
      %p75 = scmp.eq.s32.totalorder %s28, 0
      %p76 = por %p74, %p75
      %p77 = scmp.ne.s32.totalorder %s63, %s64
      %p78 = scmp.eq.s32.totalorder %s29, 1
      %p79 = por %p77, %p78
      %p81 = scmp.ne.s32.totalorder %s64, %s80
      %p82 = scmp.eq.s32.totalorder %s29, 0
      %p83 = por %p81, %p82
      %s84 = sadd.s32 %s30, %s32
      %p85 = scmp.lt.s32.totalorder %s84, 1
      %s86 = scalar_select %p85, %s84, 1
      %s87 = sadd.s32 %s49, %s41
      %p88 = scmp.lt.s32.totalorder %s87, 1
      %s89 = scalar_select %p88, %s87, 1
      %s90 = ssub.s32 %s86, %s89
      %s91 = ssub.s32 %s31, %s45
      %s92 = sor.u32 %s90, %s91
      %p93 = scmp.eq.s32.totalorder %s92, 0
      %s95 = sadd.s32 %s94, 1
      %s96 = scalar_select %p93, %s94, %s95
      %p99 = pneg %p93
      %p100 = scmp.eq.s32.totalorder %s23, 1
      %p101 = por %p99, %p100
      %p102 = scmp.ne.s32.totalorder %s94, %s97
      %p103 = scmp.eq.s32.totalorder %s23, 0
      %p104 = por %p102, %p103
      %p105 = scmp.ne.s32.totalorder %s94, %s97
      %p106 = scmp.eq.s32.totalorder %s28, 1
      %p107 = por %p105, %p106
      %p108 = scmp.ne.s32.totalorder %s97, %s98
      %p109 = scmp.eq.s32.totalorder %s28, 0
      %p110 = por %p108, %p109
      %p111 = scmp.ne.s32.totalorder %s97, %s98
      %p112 = scmp.eq.s32.totalorder %s29, 1
      %p113 = por %p111, %p112
      %p115 = scmp.ne.s32.totalorder %s98, %s114
      %p116 = scmp.eq.s32.totalorder %s29, 0
      %p117 = por %p115, %p116
      %s118 = ssub.s32 %s30, %s49
      %s119 = ssub.s32 %s31, %s45
      %s120 = sor.u32 %s118, %s119
      %p121 = scmp.eq.s32.totalorder %s120, 0
      %s123 = sadd.s32 %s122, 1
      %s124 = scalar_select %p121, %s122, %s123
      %p127 = pneg %p121
      %p128 = scmp.eq.s32.totalorder %s23, 1
      %p129 = por %p127, %p128
      %p130 = scmp.ne.s32.totalorder %s122, %s125
      %p131 = scmp.eq.s32.totalorder %s23, 0
      %p132 = por %p130, %p131
      %p133 = scmp.ne.s32.totalorder %s122, %s125
      %p134 = scmp.eq.s32.totalorder %s28, 1
      %p135 = por %p133, %p134
      %p136 = scmp.ne.s32.totalorder %s125, %s126
      %p137 = scmp.eq.s32.totalorder %s28, 0
      %p138 = por %p136, %p137
      %p139 = scmp.ne.s32.totalorder %s125, %s126
      %p140 = scmp.eq.s32.totalorder %s29, 1
      %p141 = por %p139, %p140
      %p143 = scmp.ne.s32.totalorder %s126, %s142
      %p144 = scmp.eq.s32.totalorder %s29, 0
      %p145 = por %p143, %p144
      %s146 = ssub.s32 %s30, %s49
      %s147 = ssub.s32 %s31, %s45
      %s148 = sor.u32 %s146, %s147
      %p149 = scmp.eq.s32.totalorder %s148, 0
      %s151 = sadd.s32 %s150, 1
      %s152 = scalar_select %p149, %s150, %s151
      %p155 = pneg %p149
      %p156 = scmp.eq.s32.totalorder %s23, 1
      %p157 = por %p155, %p156
      %p158 = scmp.ne.s32.totalorder %s150, %s153
      %p159 = scmp.eq.s32.totalorder %s23, 0
      %p160 = por %p158, %p159
      %p161 = scmp.ne.s32.totalorder %s150, %s153
      %p162 = scmp.eq.s32.totalorder %s28, 1
      %p163 = por %p161, %p162
      %p164 = scmp.ne.s32.totalorder %s153, %s154
      %p165 = scmp.eq.s32.totalorder %s28, 0
      %p166 = por %p164, %p165
      %p167 = scmp.ne.s32.totalorder %s153, %s154
      %p168 = scmp.eq.s32.totalorder %s29, 1
      %p169 = por %p167, %p168
      %p171 = scmp.ne.s32.totalorder %s154, %s170
      %p172 = scmp.eq.s32.totalorder %s29, 0
      %p173 = por %p171, %p172
      %s174 = ssub.s32 %s30, %s49
      %s175 = ssub.s32 %s31, %s45
      %s176 = sor.u32 %s174, %s175
      %p177 = scmp.eq.s32.totalorder %s176, 0
      %s179 = sadd.s32 %s178, 1
      %s180 = scalar_select %p177, %s178, %s179
      %p183 = pneg %p177
      %p184 = scmp.eq.s32.totalorder %s23, 1
      %p185 = por %p183, %p184
      %p186 = scmp.ne.s32.totalorder %s178, %s181
      %p187 = scmp.eq.s32.totalorder %s23, 0
      %p188 = por %p186, %p187
      %p189 = scmp.ne.s32.totalorder %s178, %s181
      %p190 = scmp.eq.s32.totalorder %s28, 1
      %p191 = por %p189, %p190
      %p192 = scmp.ne.s32.totalorder %s181, %s182
      %p193 = scmp.eq.s32.totalorder %s28, 0
      %p194 = por %p192, %p193
      %p195 = scmp.ne.s32.totalorder %s181, %s182
      %p196 = scmp.eq.s32.totalorder %s29, 1
      %p197 = por %p195, %p196
      %p199 = scmp.ne.s32.totalorder %s182, %s198
      %p200 = scmp.eq.s32.totalorder %s29, 0
      %p201 = por %p199, %p200
      %p202 = scmp.le.s32.totalorder 1, %s23
      %p203 = scmp.lt.s32.totalorder %s23, 3
      %p204 = pnand %p202, %p203
      %p205 = pneg %p204
      // Predicated region
      $region9: #{tpu_custom_call.1} parent=5 // pred_check
        _
      $region10: #{tpu_custom_call.1} parent=5 // pred_check_branch
        %207 = sbr.rel (%p204) target = $region12
      $region11: #{tpu_custom_call.1} parent=5 // pred_region
        %s208 = ssub.s32 %s23, 1
      $region12: #{tpu_custom_call.1} parent=5 // pred_fallthru
        _
      %p209 = scmp.lt.s32.totalorder %s23, 2
      // Predicated region
      $region13: #{tpu_custom_call.1} parent=5 // pred_check
        %p210 = pneg %p209
      $region14: #{tpu_custom_call.1} parent=5 // pred_check_branch
        %212 = sbr.rel (%p210) target = $region16
      $region15: #{tpu_custom_call.1} parent=5 // pred_region
        // Predicated region
        $region17: #{tpu_custom_call.1} parent=15 // pred_check
          %p213 = pneg %p70
        $region18: #{tpu_custom_call.1} parent=15 // pred_check_branch
          %215 = sbr.rel (%p213) target = $region20
        $region19: #{tpu_custom_call.1} parent=15 // pred_region
          %s216 = sand.u32 %s60, 1
          %s217 = scalar_lea.sflag [#allocation3], %s216
          %s218 = sand.u32 %s60, 1
          %s219 = smul.addr %s218, 40
          %s220 = scalar_lea.vmem [#allocation2], %s219
          %s221 = sadd.s32 %s30, %s32
          %p222 = scmp.lt.s32.totalorder %s221, 1
          %s223 = scalar_select %p222, %s221, 1
          %s224 = smul.u32 5, %s223
          %s226 = ssub.s32 640, 640
          %227 = vsyncadd %s217, %s226
          %s228 = sadd.s32 %s31, %s224
          %s229 = smul.addr %s228, 128
          %s230 = scalar_lea.hbm %s0, %s229
          %s231 = sshll.u32 %s220, 4
          %s232 = int_to_ptr.vmem [resolvable:$true] %s231
          %237 = dma.hbm_to_vmem [thread:$0]  %s230, 640, %s232, %s217, 128, 128, 8
        $region20: #{tpu_custom_call.1} parent=15 // pred_fallthru
          _
        // Predicated region
        $region21: #{tpu_custom_call.1} parent=15 // pred_check
          %p238 = pneg %p104
        $region22: #{tpu_custom_call.1} parent=15 // pred_check_branch
          %240 = sbr.rel (%p238) target = $region24
        $region23: #{tpu_custom_call.1} parent=15 // pred_region
          %s241 = sand.u32 %s94, 1
          %s242 = scalar_lea.sflag [#allocation6], %s241
          %s243 = sand.u32 %s94, 1
          %s244 = smul.addr %s243, 40
          %s245 = scalar_lea.vmem [#allocation5], %s244
          %s246 = sadd.s32 %s30, %s32
          %p247 = scmp.lt.s32.totalorder %s246, 1
          %s248 = scalar_select %p247, %s246, 1
          %s249 = smul.u32 5, %s248
          %s251 = ssub.s32 640, 640
          %252 = vsyncadd %s242, %s251
          %s253 = sadd.s32 %s31, %s249
          %s254 = smul.addr %s253, 128
          %s255 = scalar_lea.hbm %s1, %s254
          %s256 = sshll.u32 %s245, 4
          %s257 = int_to_ptr.vmem [resolvable:$true] %s256
          %262 = dma.hbm_to_vmem [thread:$0]  %s255, 640, %s257, %s242, 128, 128, 8
        $region24: #{tpu_custom_call.1} parent=15 // pred_fallthru
          _
      $region16: #{tpu_custom_call.1} parent=5 // pred_fallthru
        _
      %p263 = scmp.le.s32.totalorder 1, %s23
      %p264 = scmp.lt.s32.totalorder %s23, 3
      %p265 = pnand %p263, %p264
      %p266 = pneg %p265
      // Predicated region
      $region25: #{tpu_custom_call.1} parent=5 // pred_check
        _
      $region26: #{tpu_custom_call.1} parent=5 // pred_check_branch
        %268 = sbr.rel (%p265) target = $region28
      $region27: #{tpu_custom_call.1} parent=5 // pred_region
        %s269 = ssub.s32 %s23, 1
        %s270 = sand.u32 %s63, 1
        %s271 = scalar_lea.sflag [#allocation3], %s270
        %s272 = sand.u32 %s63, 1
        %s273 = smul.addr %s272, 40
        %s274 = scalar_lea.vmem [#allocation2], %s273
        // Predicated region
        $region29: #{tpu_custom_call.1} parent=27 // pred_check
          %p275 = pneg %p76
        $region30: #{tpu_custom_call.1} parent=27 // pred_check_branch
          %277 = sbr.rel (%p275) target = $region32
        $region31: #{tpu_custom_call.1} parent=27 // pred_region
          %278 = dma.done %s271, 640
        $region32: #{tpu_custom_call.1} parent=27 // pred_fallthru
          _
        %s279 = sand.u32 %s97, 1
        %s280 = scalar_lea.sflag [#allocation6], %s279
        %s281 = sand.u32 %s97, 1
        %s282 = smul.addr %s281, 40
        %s283 = scalar_lea.vmem [#allocation5], %s282
        // Predicated region
        $region33: #{tpu_custom_call.1} parent=27 // pred_check
          %p284 = pneg %p110
        $region34: #{tpu_custom_call.1} parent=27 // pred_check_branch
          %286 = sbr.rel (%p284) target = $region36
        $region35: #{tpu_custom_call.1} parent=27 // pred_region
          %287 = dma.done %s280, 640
        $region36: #{tpu_custom_call.1} parent=27 // pred_fallthru
          _
        %s288 = sand.u32 %s63, 1
        %s289 = scalar_lea.sflag [#allocation3], %s288
        %s290 = sand.u32 %s63, 1
        %s291 = smul.addr %s290, 40
        %s292 = scalar_lea.vmem [#allocation2], %s291
        %p293 = pneg %p76
        %p294 = pneg %p73
        %s295 = sand.u32 %s97, 1
        %s296 = scalar_lea.sflag [#allocation6], %s295
        %s297 = sand.u32 %s97, 1
        %s298 = smul.addr %s297, 40
        %s299 = scalar_lea.vmem [#allocation5], %s298
        %p300 = pneg %p110
        %p301 = pneg %p107
        %p302 = pneg %p138
        %p303 = pneg %p135
        %s304 = sand.u32 %s125, 1
        %s305 = scalar_lea.sflag [#allocation4], %s304
        %s306 = sand.u32 %s125, 1
        %s307 = smul.addr %s306, 8
        %s308 = scalar_lea.vmem [#allocation7], %s307
        %p309 = pneg %p166
        %p310 = pneg %p163
        %s311 = sand.u32 %s28, 1
        %s312 = scalar_lea.sflag [#allocation9], %s311
        %s313 = sand.u32 %s153, 1
        %s314 = smul.addr %s313, 8
        %s315 = scalar_lea.vmem [#allocation8], %s314
        %p316 = pneg %p194
        %p317 = pneg %p191
        %s318 = sand.u32 %s28, 1
        %s319 = scalar_lea.sflag [#allocation9], %s318
        %s320 = sand.u32 %s181, 1
        %s321 = smul.addr %s320, 8
        %s322 = scalar_lea.vmem [#allocation10], %s321
        %s323 = sadd.s32 %s33, %s35
        %p324 = scmp.lt.s32.totalorder %s323, 1
        %s325 = scalar_select %p324, %s323, 1
        %s326 = smul.u32 5, %s325
        %s327 = sadd.s32 %s33, %s35
        %p328 = scmp.lt.s32.totalorder %s327, 1
        %s329 = scalar_select %p328, %s327, 1
        %s330 = smul.u32 5, %s329
        %p331 = scmp.eq.s32.totalorder %s35, 0
        // Predicated region
        $region37: #{tpu_custom_call.1} parent=27 // pred_check
          %p332 = pneg %p331
        $region38: #{tpu_custom_call.1} parent=27 // pred_check_branch
          %334 = sbr.rel (%p332) target = $region40
        $region39: #{tpu_custom_call.1} parent=27 // pred_region
          %335 = vst [vmem:[%s308] sm:$0xff] 0.0
          %336 = vst [vmem:[%s315] sm:$0xff] 0.0
          %337 = vst [vmem:[%s322] sm:$0xff] 0.0
        $region40: #{tpu_custom_call.1} parent=27 // pred_fallthru
          _
        %v338 = vld [vmem:[%s274] sm:$0xff]
        %v339 = vld [vmem:[%s274 + $0x8] sm:$0xff]
        %v340 = vld [vmem:[%s274 + $0x10] sm:$0xff]
        %v341 = vld [vmem:[%s274 + $0x18] sm:$0xff]
        %v342 = vld [vmem:[%s274 + $0x20] sm:$0xff]
        %v343 = vld [vmem:[%s283] sm:$0xff]
        %v344 = vld [vmem:[%s283 + $0x8] sm:$0xff]
        %v345 = vld [vmem:[%s283 + $0x10] sm:$0xff]
        %v346 = vld [vmem:[%s283 + $0x18] sm:$0xff]
        %v347 = vld [vmem:[%s283 + $0x20] sm:$0xff]
        %v348 = vld [vmem:[%s308] sm:$0xff]
        %v349 = vmul.f32 %v343, %v338
        %v350 = vmul.f32 %v344, %v339
        %v351 = vmul.f32 %v345, %v340
        %v352 = vmul.f32 %v346, %v341
        %v353 = vmul.f32 %v347, %v342
        %v354 = vadd.f32 %v349, %v350
        %v355 = vadd.f32 %v354, %v351
        %v356 = vadd.f32 %v355, %v352
        %v357 = vadd.f32 %v356, %v353
        %v358 = vadd.f32 %v348, %v357
        %359 = vst [vmem:[%s308] sm:$0xff] %v358
        %v360 = vld [vmem:[%s315] sm:$0xff]
        %v361 = vadd.f32 %v338, %v339
        %v362 = vadd.f32 %v361, %v340
        %v363 = vadd.f32 %v362, %v341
        %v364 = vadd.f32 %v363, %v342
        %v365 = vadd.f32 %v360, %v364
        %366 = vst [vmem:[%s315] sm:$0xff] %v365
        %v367 = vld [vmem:[%s322] sm:$0xff]
        %v368 = vadd.f32 %v343, %v344
        %v369 = vadd.f32 %v368, %v345
        %v370 = vadd.f32 %v369, %v346
        %v371 = vadd.f32 %v370, %v347
        %v372 = vadd.f32 %v367, %v371
        %373 = vst [vmem:[%s322] sm:$0xff] %v372
        %s374 = sand.u32 %s125, 1
        %s375 = scalar_lea.sflag [#allocation4], %s374
        %s376 = sand.u32 %s125, 1
        %s377 = smul.addr %s376, 8
        %s378 = scalar_lea.vmem [#allocation7], %s377
        %s379 = sand.u32 %s28, 1
        %s380 = scalar_lea.sflag [#allocation9], %s379
        %s381 = sand.u32 %s153, 1
        %s382 = smul.addr %s381, 8
        %s383 = scalar_lea.vmem [#allocation8], %s382
        %s384 = sand.u32 %s28, 1
        %s385 = scalar_lea.sflag [#allocation9], %s384
        %s386 = sand.u32 %s181, 1
        %s387 = smul.addr %s386, 8
        %s388 = scalar_lea.vmem [#allocation10], %s387
        // Predicated region
        $region41: #{tpu_custom_call.1} parent=27 // pred_check
          %p389 = pneg %p135
        $region42: #{tpu_custom_call.1} parent=27 // pred_check_branch
          %391 = sbr.rel (%p389) target = $region44
        $region43: #{tpu_custom_call.1} parent=27 // pred_region
          %s393 = ssub.s32 128, 128
          %394 = vsyncadd %s375, %s393
          %s395 = sadd.s32 %s34, %s33
          %s396 = smul.addr %s395, 128
          %s397 = scalar_lea.hbm %s2, %s396
          %s399 = sshll.u32 %s378, 4
          %s400 = int_to_ptr.vmem [resolvable:$true] %s399
          %402 = dma.vmem_to_hbm [thread:$0]  %s400, 128, %s397, %s375
        $region44: #{tpu_custom_call.1} parent=27 // pred_fallthru
          _
        // Predicated region
        $region45: #{tpu_custom_call.1} parent=27 // pred_check
          %p403 = pneg %p163
        $region46: #{tpu_custom_call.1} parent=27 // pred_check_branch
          %405 = sbr.rel (%p403) target = $region48
        $region47: #{tpu_custom_call.1} parent=27 // pred_region
          %s407 = ssub.s32 128, 128
          %408 = vsyncadd %s380, %s407
          %s409 = sadd.s32 %s34, %s33
          %s410 = smul.addr %s409, 128
          %s411 = scalar_lea.hbm %s3, %s410
          %s413 = sshll.u32 %s383, 4
          %s414 = int_to_ptr.vmem [resolvable:$true] %s413
          %416 = dma.vmem_to_hbm [thread:$0]  %s414, 128, %s411, %s380
        $region48: #{tpu_custom_call.1} parent=27 // pred_fallthru
          _
        // Predicated region
        $region49: #{tpu_custom_call.1} parent=27 // pred_check
          %p417 = pneg %p191
        $region50: #{tpu_custom_call.1} parent=27 // pred_check_branch
          %419 = sbr.rel (%p417) target = $region52
        $region51: #{tpu_custom_call.1} parent=27 // pred_region
          %s421 = ssub.s32 128, 128
          %422 = vsyncadd %s385, %s421
          %s423 = sadd.s32 %s34, %s33
          %s424 = smul.addr %s423, 128
          %s425 = scalar_lea.hbm %s4, %s424
          %s427 = sshll.u32 %s388, 4
          %s428 = int_to_ptr.vmem [resolvable:$true] %s427
          %430 = dma.vmem_to_hbm [thread:$0]  %s428, 128, %s425, %s385
        $region52: #{tpu_custom_call.1} parent=27 // pred_fallthru
          _
      $region28: #{tpu_custom_call.1} parent=5 // pred_fallthru
        _
      %p431 = scmp.le.s32.totalorder 2, %s23
      // Predicated region
      $region53: #{tpu_custom_call.1} parent=5 // pred_check
        %p432 = pneg %p431
      $region54: #{tpu_custom_call.1} parent=5 // pred_check_branch
        %434 = sbr.rel (%p432) target = $region56
      $region55: #{tpu_custom_call.1} parent=5 // pred_region
        %s435 = ssub.s32 %s23, 2
        // Predicated region
        $region57: #{tpu_custom_call.1} parent=55 // pred_check
          %p436 = pneg %p141
        $region58: #{tpu_custom_call.1} parent=55 // pred_check_branch
          %438 = sbr.rel (%p436) target = $region60
        $region59: #{tpu_custom_call.1} parent=55 // pred_region
          %s439 = sand.u32 %s126, 1
          %s440 = scalar_lea.sflag [#allocation4], %s439
          %s441 = sand.u32 %s126, 1
          %s442 = smul.addr %s441, 8
          %s443 = scalar_lea.vmem [#allocation7], %s442
          %444 = dma.done %s440, 128
        $region60: #{tpu_custom_call.1} parent=55 // pred_fallthru
          _
        // Predicated region
        $region61: #{tpu_custom_call.1} parent=55 // pred_check
          %p445 = pneg %p169
        $region62: #{tpu_custom_call.1} parent=55 // pred_check_branch
          %447 = sbr.rel (%p445) target = $region64
        $region63: #{tpu_custom_call.1} parent=55 // pred_region
          %s448 = sand.u32 %s29, 1
          %s449 = scalar_lea.sflag [#allocation9], %s448
          %s450 = sand.u32 %s154, 1
          %s451 = smul.addr %s450, 8
          %s452 = scalar_lea.vmem [#allocation8], %s451
          %453 = dma.done %s449, 128
        $region64: #{tpu_custom_call.1} parent=55 // pred_fallthru
          _
        // Predicated region
        $region65: #{tpu_custom_call.1} parent=55 // pred_check
          %p454 = pneg %p197
        $region66: #{tpu_custom_call.1} parent=55 // pred_check_branch
          %456 = sbr.rel (%p454) target = $region68
        $region67: #{tpu_custom_call.1} parent=55 // pred_region
          %s457 = sand.u32 %s29, 1
          %s458 = scalar_lea.sflag [#allocation9], %s457
          %s459 = sand.u32 %s182, 1
          %s460 = smul.addr %s459, 8
          %s461 = scalar_lea.vmem [#allocation10], %s460
          %462 = dma.done %s458, 128
        $region68: #{tpu_custom_call.1} parent=55 // pred_fallthru
          _
      $region56: #{tpu_custom_call.1} parent=5 // pred_fallthru
        _
    $region6: #{tpu_custom_call.1} parent=1 // loop_footer
      %s27 = sadd.s32 1, %s23
    $region7: #{tpu_custom_call.1} parent=1 // loop_footer_branch
      %22 = sbr.rel target = $region3
    $region8: #{tpu_custom_call.1} parent=1 // loop_exit
      _
    %463 = vsyncpa [#allocation3], 1
    %s464 = scalar_lea.sflag [#allocation3], 1
    %465 = vsyncpa %s464, 1
    %466 = vsyncpa [#allocation6], 1
    %s467 = scalar_lea.sflag [#allocation6], 1
    %468 = vsyncpa %s467, 1
    %469 = vsyncpa [#allocation4], 1
    %s470 = scalar_lea.sflag [#allocation4], 1
    %471 = vsyncpa %s470, 1
    %472 = vsyncpa [#allocation9], 1
    %s473 = scalar_lea.sflag [#allocation9], 1
    %474 = vsyncpa %s473, 1

</llo_original>
